<compile_context>
chip_gen: v5e
topology: v5e:2x2
jax: 0.10.0
libtpu: 0.0.40
codegen_flags: <defaults>
</compile_context>

<pallas_src>
import jax
import jax.numpy as jnp
from jax.experimental import pallas as pl
from jax.experimental.pallas import tpu as pltpu

_MIB = 1024 * 1024


def _round_up(x: int, m: int) -> int:
    return (x + m - 1) // m * m


def _cdiv(a: int, b: int) -> int:
    return (a + b - 1) // b


def _balanced_tile(dim: int, tile: int, gran: int) -> int:
    """Largest tile <= `tile` (granularity `gran`) minimizing pad waste."""
    if dim <= tile:
        return _round_up(dim, gran)
    n_blocks = _cdiv(dim, tile)
    return _round_up(_cdiv(dim, n_blocks), gran)


def _vmem_budget_bytes() -> int:
    # Per-generation VMEM capacity (v5e/v6e: 128 MiB, v7x: 64 MiB) with
    # headroom for Mosaic internal scratch. Conservative fallback: 64 MiB.
    cap = 64 * _MIB
    try:
        info = pltpu.get_tpu_info()
        cap = int(getattr(info, "vmem_capacity_bytes", cap))
    except Exception:
        pass
    return int(cap * 0.8)


def _lm_head_kernel_acc(x_ref, w_ref, b_ref, o_ref, acc_ref):
    # 3-D grid (rows, vocab, hidden); hidden is the resident reduction axis.
    @pl.when(pl.program_id(2) == 0)
    def _init():
        acc_ref[...] = jnp.zeros_like(acc_ref)

    acc_ref[...] += jnp.dot(x_ref[...], w_ref[...],
                            preferred_element_type=jnp.float32)

    @pl.when(pl.program_id(2) == pl.num_programs(2) - 1)
    def _finalize():
        o_ref[...] = (acc_ref[...] + b_ref[...]).astype(o_ref.dtype)


def _lm_head_kernel_single(x_ref, w_ref, b_ref, o_ref):
    # Single K step: no accumulator scratch, write the tile directly.
    o_ref[...] = (jnp.dot(x_ref[...], w_ref[...],
                          preferred_element_type=jnp.float32)
                  + b_ref[...]).astype(o_ref.dtype)


def lm_head_matmul(x, w, b, *, tm=None, tn=1024, tk=512,
                   out_dtype=jnp.bfloat16):
    """logits = x @ w + b, tiled over (tokens, vocab[, hidden]) on TPU.

    x: (M, H) activations, w: (H, V) head weight, b: (V,) or (1, V) bias.
    Returns (M, V) logits in `out_dtype` (f32 accumulation inside).
    """
    M, H = x.shape
    Hw, V = w.shape
    assert H == Hw, f"hidden mismatch: {H} vs {Hw}"
    out_bytes = jnp.dtype(out_dtype).itemsize

    budget = _vmem_budget_bytes()
    if tm is None:
        # Primary knob: bigger tm => the (H, V) weight is re-streamed fewer
        # times. Go bigger on 128-MiB-VMEM generations (v5e/v6e).
        tm = 2048 if budget >= 80 * _MIB else 1024

    tm_ = _balanced_tile(M, tm, 8)
    tn_ = _balanced_tile(V, tn, 128)
    if H <= tk:
        tk_ = H                      # single contraction step, no K padding
    else:
        assert tk % 128 == 0, "tk must be a multiple of 128 when H > tk"
        tk_ = _balanced_tile(H, tk, 128)

    # Double-buffered bf16 x/w + f32 bias, double-buffered output, plus the
    # f32 accumulator (multi-K path only; counted anyway as slack).
    def footprint(tm_i):
        return (2 * (tm_i * tk_ * 2 + tk_ * tn_ * 2 + tn_ * 4)
                + 2 * tm_i * tn_ * out_bytes
                + tm_i * tn_ * 4)

    while footprint(tm_) > budget and tm_ > 8:
        tm_ = max(8, _round_up(tm_ // 2, 8))

    Mp = _round_up(M, tm_)
    Vp = _round_up(V, tn_)
    Kp = H if tk_ == H else _round_up(H, tk_)

    # Stream weights/activations in bf16; bias stays f32 (added post-accum).
    xp = x.astype(jnp.bfloat16)
    wp = w.astype(jnp.bfloat16)
    bp = jnp.asarray(b, jnp.float32).reshape(1, V)
    if (Mp, Kp) != (M, H):
        xp = jnp.pad(xp, ((0, Mp - M), (0, Kp - H)))
    if (Kp, Vp) != (H, V):
        # NOTE: at real LM-head sizes pick V as a multiple of 128 (typical) or
        # pre-pad/pre-cast w once outside the hot path so this never copies.
        wp = jnp.pad(wp, ((0, Kp - H), (0, Vp - V)))
    if Vp != V:
        bp = jnp.pad(bp, ((0, 0), (0, Vp - V)))

    m_blocks, n_blocks, k_steps = Mp // tm_, Vp // tn_, Kp // tk_

    flops = 2 * Mp * Kp * Vp
    bytes_accessed = (Mp * Kp * 2 * n_blocks      # x re-read per vocab block
                      + Kp * Vp * 2 * m_blocks    # w re-read per row block
                      + Vp * 4 * m_blocks         # bias
                      + Mp * Vp * out_bytes)      # logits written once
    cost = pl.CostEstimate(flops=int(flops), transcendentals=0,
                           bytes_accessed=int(bytes_accessed))
    vmem_limit = int(min(max(2 * footprint(tm_), 32 * _MIB), budget))

    if k_steps == 1:
        kernel = _lm_head_kernel_single
        grid_spec = pltpu.PrefetchScalarGridSpec(
            num_scalar_prefetch=0,
            grid=(m_blocks, n_blocks),
            in_specs=[
                pl.BlockSpec((tm_, tk_), lambda i, j: (i, 0)),
                pl.BlockSpec((tk_, tn_), lambda i, j: (0, j)),
                pl.BlockSpec((1, tn_), lambda i, j: (0, j)),
            ],
            out_specs=pl.BlockSpec((tm_, tn_), lambda i, j: (i, j)),
        )
        dim_sem = ("parallel", "parallel")
    else:
        kernel = _lm_head_kernel_acc
        grid_spec = pltpu.PrefetchScalarGridSpec(
            num_scalar_prefetch=0,
            grid=(m_blocks, n_blocks, k_steps),
            in_specs=[
                pl.BlockSpec((tm_, tk_), lambda i, j, k: (i, k)),
                pl.BlockSpec((tk_, tn_), lambda i, j, k: (k, j)),
                pl.BlockSpec((1, tn_), lambda i, j, k: (0, j)),
            ],
            out_specs=pl.BlockSpec((tm_, tn_), lambda i, j, k: (i, j)),
            scratch_shapes=[pltpu.VMEM((tm_, tn_), jnp.float32)],
        )
        dim_sem = ("parallel", "parallel", "arbitrary")

    out = pl.pallas_call(
        kernel,
        out_shape=jax.ShapeDtypeStruct((Mp, Vp), out_dtype),
        grid_spec=grid_spec,
        compiler_params=pltpu.CompilerParams(
            dimension_semantics=dim_sem,
            vmem_limit_bytes=vmem_limit,
        ),
        cost_estimate=cost,
    )(xp, wp, bp)

    if (Mp, Vp) != (M, V):
        out = out[:M, :V]
    return out


def _forward_impl(embedding, head_w, head_b, token_ids):
    B, S = token_ids.shape
    H = embedding.shape[1]
    V = head_w.shape[1]
    # TODO(synk): fuse the embedding gather into the kernel via
    # PrefetchScalarGridSpec(num_scalar_prefetch=1) + pl.Element row gather to
    # avoid the (M, H) HBM round trip at large H.
    x = jnp.take(embedding, token_ids.reshape(-1), axis=0)        # (B*S, H)
    logits = lm_head_matmul(x, head_w, head_b)                    # (B*S, V)
    return logits.reshape(B, S, V), x.reshape(B, S, H)


_forward_jit = jax.jit(_forward_impl)


class PallasLM:
    """Concrete stand-in for the abstract `Model`: token_ids -> (logits, dict)."""

    def __init__(self, vocab_size=128, hidden=32, seed=0):
        k = jax.random.PRNGKey(seed)
        k_emb, k_head, k_bias = jax.random.split(k, 3)
        self.vocab_size = vocab_size
        self.hidden = hidden
        # Deterministic synthetic parameters (no checkpoint load). Weights are
        # pre-cast to bf16 once here (not per call): the LM head is
        # weight-streaming bound, so bf16 halves HBM traffic; accumulation
        # stays f32 inside the kernel. Bias stays f32 and is pre-reshaped.
        self.embedding = (jax.random.normal(k_emb, (vocab_size, hidden),
                                            jnp.float32) * 0.02
                          ).astype(jnp.bfloat16)
        self.head_w = (jax.random.normal(k_head, (hidden, vocab_size),
                                         jnp.float32) * 0.02
                       ).astype(jnp.bfloat16)
        self.head_b = (jax.random.normal(k_bias, (1, vocab_size),
                                         jnp.float32) * 0.01)

    def forward(self, token_ids, **kwargs):
        logits, hidden = _forward_jit(self.embedding, self.head_w,
                                      self.head_b, token_ids)
        return logits, {"hidden": hidden}


if __name__ == "__main__":
    # --- small end-to-end check (model forward, jitted, single-K fast path) --
    B, S, H, V = 2, 8, 32, 128
    key = jax.random.PRNGKey(0)
    token_ids = jax.random.randint(key, (B, S), 0, V, dtype=jnp.int32)

    model = PallasLM(vocab_size=V, hidden=H, seed=0)
    logits, extras = model.forward(token_ids)
    jax.block_until_ready(logits)
    assert logits.shape == (B, S, V)
    assert extras["hidden"].shape == (B, S, H)

    x_ref = jnp.take(model.embedding, token_ids.reshape(-1),
                     axis=0).astype(jnp.float32)
    ref = (jnp.dot(x_ref, model.head_w.astype(jnp.float32),
                   precision=jax.lax.Precision.HIGHEST)
           + model.head_b).reshape(B, S, V)
    assert jnp.allclose(logits.astype(jnp.float32), ref, atol=5e-3, rtol=5e-3)

    # --- kernel check exercising M/V/K tiling, K padding & the accumulator ---
    M2, H2, V2 = 20, 160, 384
    kx, kw, kb = jax.random.split(jax.random.PRNGKey(1), 3)
    x2 = (jax.random.normal(kx, (M2, H2), jnp.float32)).astype(jnp.bfloat16)
    w2 = (jax.random.normal(kw, (H2, V2), jnp.float32) * 0.05
          ).astype(jnp.bfloat16)
    b2 = jax.random.normal(kb, (1, V2), jnp.float32) * 0.01

    out2 = lm_head_matmul(x2, w2, b2, tm=8, tn=128, tk=128)
    jax.block_until_ready(out2)
    assert out2.shape == (M2, V2)
    ref2 = jnp.dot(x2.astype(jnp.float32), w2.astype(jnp.float32),
                   precision=jax.lax.Precision.HIGHEST) + b2
    assert jnp.allclose(out2.astype(jnp.float32), ref2, atol=2e-2, rtol=2e-2)

    print("KERNEL_OK")
</pallas_src>

<mosaic_0001>
module attributes {stable_mosaic.version = 11 : i64} {
  func.func @_lm_head_kernel_single(%arg0: i32, %arg1: i32, %arg2: memref<16x32xbf16, #tpu.memory_space<vmem>>, %arg3: memref<32x128xbf16, #tpu.memory_space<vmem>>, %arg4: memref<1x128xf32, #tpu.memory_space<vmem>>, %arg5: memref<16x128xbf16, #tpu.memory_space<vmem>>) attributes {dimension_semantics = [#tpu.dimension_semantics<parallel>, #tpu.dimension_semantics<parallel>], iteration_bounds = array<i64: 1, 1>, scalar_prefetch = 0 : i64, scratch_operands = 0 : i64, tpu.core_type = #tpu.core_type<tc>, window_params = [{transform_indices = @transform_0, window_bounds = array<i64: 16, 32>}, {transform_indices = @transform_1, window_bounds = array<i64: 32, 128>}, {transform_indices = @transform_2, window_bounds = array<i64: 1, 128>}, {transform_indices = @transform_3, window_bounds = array<i64: 16, 128>}]} {
    %c0 = arith.constant 0 : index
    %c0_0 = arith.constant 0 : index
    %0 = vector.load %arg2[%c0, %c0_0] : memref<16x32xbf16, #tpu.memory_space<vmem>>, vector<16x32xbf16>
    %c0_1 = arith.constant 0 : index
    %c0_2 = arith.constant 0 : index
    %1 = vector.load %arg3[%c0_1, %c0_2] : memref<32x128xbf16, #tpu.memory_space<vmem>>, vector<32x128xbf16>
    %cst = arith.constant dense<0.000000e+00> : vector<16x128xf32>
    %2 = tpu.matmul %0, %1, %cst {dimension_numbers = #tpu.dot_dimension_numbers<[1], [0], [0], [1], [0, 0, 1, 1], [], []>} : vector<16x32xbf16>, vector<32x128xbf16>, vector<16x128xf32> -> vector<16x128xf32>
    %c0_3 = arith.constant 0 : index
    %c0_4 = arith.constant 0 : index
    %3 = vector.load %arg4[%c0_3, %c0_4] : memref<1x128xf32, #tpu.memory_space<vmem>>, vector<1x128xf32>
    %4 = vector.broadcast %3 : vector<1x128xf32> to vector<16x128xf32>
    %5 = arith.addf %2, %4 : vector<16x128xf32>
    %6 = arith.truncf %5 : vector<16x128xf32> to vector<16x128xbf16>
    %c0_5 = arith.constant 0 : index
    %c0_6 = arith.constant 0 : index
    %7 = vector.load %arg5[%c0_5, %c0_6] : memref<16x128xbf16, #tpu.memory_space<vmem>>, vector<16x128xbf16>
    tpu.vector_store %arg5[%c0_5, %c0_6], %6 {strides = array<i32>} : memref<16x128xbf16, #tpu.memory_space<vmem>>, vector<16x128xbf16>,
    return
  }
  func.func @transform_0(%arg0: i32, %arg1: i32) -> (i32, i32) {
    %c0_i32 = arith.constant 0 : i32
    %c0_i32_0 = arith.constant 0 : i32
    return %arg0, %c0_i32 : i32, i32
  }
  func.func @transform_1(%arg0: i32, %arg1: i32) -> (i32, i32) {
    %c0_i32 = arith.constant 0 : i32
    %c0_i32_0 = arith.constant 0 : i32
    return %c0_i32, %arg1 : i32, i32
  }
  func.func @transform_2(%arg0: i32, %arg1: i32) -> (i32, i32) {
    %c0_i32 = arith.constant 0 : i32
    %c0_i32_0 = arith.constant 0 : i32
    return %c0_i32, %arg1 : i32, i32
  }
  func.func @transform_3(%arg0: i32, %arg1: i32) -> (i32, i32) {
    %c0_i32 = arith.constant 0 : i32
    return %arg0, %arg1 : i32, i32
  }
}

</mosaic_0001>

<llo_original>
// kernel: _forward_impl.1
$region0: #{_forward_impl.1}
  #allocation0 [shape = 'u32[]', space=smem, size = 0x4, offset = 0x4, fixed_abs, tag = 'smem constant byte address 0x4 - core index']
  #allocation1 [shape = 'u32[72,128]{1,0:T(1,128)}', space=vmem, size = 0x9000, scoped, tag = 'internal scratch']
  %s0 = inlined_call_operand.vmem [shape: bf16[16,32], index: 0, kind: input, shape index: {}]
  %s1 = inlined_call_operand.vmem [shape: bf16[32,128], index: 1, kind: input, shape index: {}]
  %s2 = inlined_call_operand.vmem [shape: f32[1,128], index: 2, kind: input, shape index: {}]
  %s3 = inlined_call_operand.hbm [shape: bf16[16,128], index: 3, kind: output, shape index: {}]
  %s4 = sld [smem:[#allocation0]]
  $region22: #{_forward_impl.1} parent=0
    _
  %s6 = ssub.s32 1, %s4
  %s7 = scalar_select 0, %s6, %s4
  $region1: #{_forward_impl.1} parent=0
    #allocation2 [shape = 'u8[4096]{0}', space=vmem, size = 0x1000, scoped, tag = 'output window, operand 0, single buffered']
    #allocation3 [shape = 's32[1]{0}', space=sflag, size = 0x4, scoped, tag = 'scoped memory for _forward_impl.1']
    %8 = vsyncpa [#allocation3], 0
    // Predicated region
    $region2: #{_forward_impl.1} parent=1 // pred_check
      _
    $region3: #{_forward_impl.1} parent=1 // pred_check_branch
      %10 = sbr.rel (0) target = $region5
    $region4: #{_forward_impl.1} parent=1 // pred_region
      _
    $region5: #{_forward_impl.1} parent=1 // pred_fallthru
      _
    // Predicated region
    $region6: #{_forward_impl.1} parent=1 // pred_check
      _
    $region7: #{_forward_impl.1} parent=1 // pred_check_branch
      %12 = sbr.rel (0) target = $region9
    $region8: #{_forward_impl.1} parent=1 // pred_region
      _
    $region9: #{_forward_impl.1} parent=1 // pred_fallthru
      _
    // Predicated region
    $region10: #{_forward_impl.1} parent=1 // pred_check
      _
    $region11: #{_forward_impl.1} parent=1 // pred_check_branch
      %14 = sbr.rel (0) target = $region13
    $region12: #{_forward_impl.1} parent=1 // pred_region
      _
    $region13: #{_forward_impl.1} parent=1 // pred_fallthru
      _
    %v16 = vld [vmem:[%s0] sm:$0xf]
    %v17 = vld [vmem:[%s0 + $0x4] sm:$0xf]
    %v18 = vld [vmem:[%s1] sm:$0xf]
    %v19 = vld [vmem:[%s1 + $0x4] sm:$0xf]
    %v20 = vld [vmem:[%s1 + $0x8] sm:$0xf]
    %v21 = vld [vmem:[%s1 + $0xc] sm:$0xf]
    %v22 = vld [vmem:[%s2] sm:$0x1]
    %v24 = vperm.slane %v22, 0
    %v28 = vunpack.c.l.b16 %v16
    %v29 = vunpack.c.l.b16 %v17
    %v30 = vpack.c.b16 %v29, %v28
    %v35 = vunpack.c.l.b16 %v18
    %v36 = vunpack.c.l.b16 %v19
    %v37 = vunpack.c.l.b16 %v20
    %v38 = vunpack.c.l.b16 %v21
    %v39 = vpack.c.b16 %v36, %v35
    %v40 = vpack.c.b16 %v38, %v37
    %vm43 = vcmask 261120
    %v45 = vsel %vm43, %v30, 0
    %47 = vmatpush.bf16.msra.mxu0 0
    %48 = vmatpush.bf16.msra.mxu0 0
    %49 = vmatpush.bf16.msra.mxu0 0
    %50 = vmatpush.bf16.msra.mxu0 0
    %51 = vmatpush.bf16.msra.mxu0 0
    %52 = vmatpush.bf16.msra.mxu0 0
    %53 = vmatpush.bf16.msra.mxu0 %v40
    %54 = vmatpush.bf16.msra.mxu0 %v39
    %55 = vmatmul.bf16.gmra.mxu0 %v45
    %v56 = vpop.f32.mrf.mxu0
    %v57 = vadd.f32 %v24, %v56
    %v58 = vpop.f32.mrf.mxu0
    %v59 = vadd.f32 %v24, %v58
    %60 = vdwg.mxu0
    %v61 = vpack.c.bf16 %v57, %v57
    %v62 = vpack.c.bf16 %v59, %v59
    %63 = vst [vmem:[#allocation2] sm:$0xf] %v61
    %64 = vst [vmem:[#allocation2 + $0x4] sm:$0xf] %v62
    // Predicated region
    $region14: #{_forward_impl.1} parent=1 // pred_check
      _
    $region15: #{_forward_impl.1} parent=1 // pred_check_branch
      %66 = sbr.rel (0) target = $region17
    $region16: #{_forward_impl.1} parent=1 // pred_region
      %68 = vsyncadd [#allocation3], 0
      %s69 = sshll.u32 [#allocation2], 4
      %s70 = int_to_ptr.vmem [resolvable:$true] %s69
      %s71 = sshll.u32 %s3, 4
      %s72 = int_to_ptr.hbm [resolvable:$true] %s71
      %77 = dma.vmem_to_hbm [thread:$0]  %s70, 128, %s72, [#allocation3], 64, 64, 4
    $region17: #{_forward_impl.1} parent=1 // pred_fallthru
      _
    // Predicated region
    $region18: #{_forward_impl.1} parent=1 // pred_check
      _
    $region19: #{_forward_impl.1} parent=1 // pred_check_branch
      %79 = sbr.rel (0) target = $region21
    $region20: #{_forward_impl.1} parent=1 // pred_region
      %81 = dma.done [#allocation3], 128
    $region21: #{_forward_impl.1} parent=1 // pred_fallthru
      _
    %82 = vsyncpa [#allocation3], 1

</llo_original>
